<compile_context>
chip_gen: v7x
topology: tpu7x:2x2x1
jax: 0.10.0
libtpu: 0.0.40
codegen_flags: <defaults>
</compile_context>

<pallas_src>
import functools

import jax
import jax.numpy as jnp
from jax.experimental import pallas as pl
from jax.experimental.pallas import tpu as pltpu

LANE = 128     # TPU lane width: keep every feature axis a multiple of this
SUBLANE = 8    # f32 sublane granularity for the batch axis
TM_MAX = 512   # batch-tile upper bound (sweep 256-1024 for large batches)


def _round_up(x, m):
    return (x + m - 1) // m * m


def fused_mlp_kernel(x_ref, *refs):
    """Whole MLP forward for one batch tile.

    refs = (w0, b0, w1, b1, ..., w_{L-1}, b_{L-1}, o_ref).
    Weights are bf16 (VMEM-resident across grid steps), biases f32.
    Per layer: z = h @ W + b (MXU, f32 accumulation; bias add on the VPU),
    then sigmoid(z) = 0.5*tanh(0.5*z) + 0.5 (one EUP push per element).
    The activation never leaves vregs/VMEM between layers; the static layer
    count means this Python loop fully unrolls at trace time.
    """
    o_ref = refs[-1]
    wb = refs[:-1]
    n_layers = len(wb) // 2
    h = x_ref[...]                               # bf16 activation tile
    for li in range(n_layers):
        w = wb[2 * li][...]
        b = wb[2 * li + 1][...]
        z = jnp.dot(h, w, preferred_element_type=jnp.float32) + b
        a = 0.5 * jnp.tanh(0.5 * z) + 0.5        # exact sigmoid, no overflow
        # bf16 only for feeding the next matmul; final layer stays f32.
        h = a.astype(w.dtype) if li < n_layers - 1 else a
    o_ref[...] = h.astype(o_ref.dtype)


def prepare_params(params, num_input_nodes, weight_dtype=jnp.bfloat16):
    """One-time parameter prep (call OUTSIDE the per-step forward).

    Zero-pads every layer to lane-dense (128-multiple) feature widths and
    casts weights to bf16.  Padded weight rows are zero, making the padded
    activation lanes (sigmoid(0)=0.5) inert for the next layer.
    """
    dims = tuple([num_input_nodes] + [w.shape[1] for w, _ in params])
    pdims = tuple(_round_up(d, LANE) for d in dims)
    flat = []
    for li, (w, b) in enumerate(params):
        kin, kout = w.shape
        w_pad = (jnp.zeros((pdims[li], pdims[li + 1]), weight_dtype)
                 .at[:kin, :kout].set(w.astype(weight_dtype)))
        b_pad = (jnp.zeros((1, pdims[li + 1]), jnp.float32)
                 .at[0, :kout].set(b.astype(jnp.float32)))
        flat += [w_pad, b_pad]
    return tuple(flat), dims, pdims


@functools.partial(jax.jit, static_argnames=("dims", "pdims"))
def mlp_forward(x, flat_params, dims, pdims):
    """Fused forward: y = sigmoid(... sigmoid(x @ W0 + b0) ... @ W_L + b_L)."""
    batch, in_dim = x.shape
    out_dim = dims[-1]
    n_layers = len(pdims) - 1

    # Batch tiling: one tile for small batches, TM_MAX-sized tiles otherwise.
    tm = min(TM_MAX, _round_up(batch, SUBLANE))
    m_pad = _round_up(batch, tm)
    grid_m = m_pad // tm

    # Only the activation gets padded/cast per call (weights were prepped once).
    x_pad = (jnp.zeros((m_pad, pdims[0]), jnp.bfloat16)
             .at[:batch, :in_dim].set(x.astype(jnp.bfloat16)))

    # x / out stream per batch tile; weights & biases are full-array blocks
    # with a constant index map => DMA'd once and VMEM-resident across steps.
    in_specs = [pl.BlockSpec((tm, pdims[0]), lambda i: (i, 0))]
    in_specs += [pl.BlockSpec(a.shape, lambda i: (0, 0)) for a in flat_params]
    out_specs = pl.BlockSpec((tm, pdims[-1]), lambda i: (i, 0))

    flops = sum(2 * m_pad * pdims[i] * pdims[i + 1] for i in range(n_layers))
    transcendentals = sum(m_pad * pdims[i + 1] for i in range(n_layers))
    bytes_accessed = (x_pad.size * x_pad.dtype.itemsize
                      + sum(a.size * a.dtype.itemsize for a in flat_params)
                      + m_pad * pdims[-1] * 4)
    cost = pl.CostEstimate(flops=flops,
                           transcendentals=transcendentals,
                           bytes_accessed=bytes_accessed)

    # VMEM budget: resident weights/biases + double-buffered x/out tiles,
    # with 2x headroom, clamped to the smallest physical VMEM (v7x: 64 MiB).
    resident = sum(a.size * a.dtype.itemsize for a in flat_params)
    streamed = 2 * (tm * pdims[0] * 2 + tm * pdims[-1] * 4)
    vmem_limit = int(min(64 * 1024 * 1024,
                         max(32 * 1024 * 1024, 2 * (resident + streamed))))

    out_pad = pl.pallas_call(
        fused_mlp_kernel,
        out_shape=jax.ShapeDtypeStruct((m_pad, pdims[-1]), jnp.float32),
        grid=(grid_m,),
        in_specs=in_specs,
        out_specs=out_specs,
        compiler_params=pltpu.CompilerParams(
            # Batch tiles are independent: shard them across v7x's 2 TCs.
            dimension_semantics=("parallel",),
            vmem_limit_bytes=vmem_limit),
        cost_estimate=cost,
    )(x_pad, *flat_params)

    # TODO(synk): for very wide layers (hidden >= ~4096) add N/K grid tiling
    # (256-multiples on v6e/v7x) with an f32 accumulator + pl.when epilogue,
    # since resident weights then exceed v7x's 64 MiB VMEM.
    return out_pad[:batch, :out_dim]


def init_mlp_params(key, num_input_nodes, num_output_nodes,
                    num_hidden_layers, num_hidden_nodes):
    """Deterministic synthetic init mirroring the module's layer structure:
    input (in->hidden), num_hidden_layers x (hidden->hidden), output
    (hidden->out).  (PyTorch's init_network_params is unspecified.)"""
    dims = ([num_input_nodes]
            + [num_hidden_nodes] * (num_hidden_layers + 1)
            + [num_output_nodes])
    params = []
    for fan_in, fan_out in zip(dims[:-1], dims[1:]):
        key, kw, kb = jax.random.split(key, 3)
        w = jax.random.normal(kw, (fan_in, fan_out), jnp.float32) * 0.1
        b = jax.random.normal(kb, (fan_out,), jnp.float32) * 0.1
        params.append((w, b))
    return params


def mlp_reference(x, params):
    # Pure-JAX (f32) reference of the PyTorch forward(): every layer,
    # including the output layer, is followed by Sigmoid.
    for w, b in params:
        x = jax.nn.sigmoid(x @ w + b)
    return x


if __name__ == "__main__":
    key = jax.random.PRNGKey(0)
    key, kx = jax.random.split(key)

    batch = 8
    num_input_nodes = 32
    num_hidden_nodes = 64
    num_output_nodes = 16
    num_hidden_layers = 2

    params = init_mlp_params(key, num_input_nodes, num_output_nodes,
                             num_hidden_layers, num_hidden_nodes)
    # One-time prep: pad + bf16-cast weights (kept across calls).
    flat_params, dims, pdims = prepare_params(params, num_input_nodes)

    x = jax.random.normal(kx, (batch, num_input_nodes), jnp.float32)

    out = jax.block_until_ready(mlp_forward(x, flat_params, dims, pdims))

    assert out.shape == (batch, num_output_nodes)
    ref = mlp_reference(x, params)
    # bf16 matmul inputs => small quantization error vs. the f32 reference.
    max_err = float(jnp.max(jnp.abs(out - ref)))
    assert jnp.allclose(out, ref, rtol=2e-2, atol=2e-2), max_err
    print("KERNEL_OK")
</pallas_src>

<mosaic_0001>
module attributes {stable_mosaic.version = 11 : i64} {
  func.func @fused_mlp_kernel(%arg0: i32, %arg1: memref<8x128xbf16, #tpu.memory_space<vmem>>, %arg2: memref<128x128xbf16, #tpu.memory_space<vmem>>, %arg3: memref<1x128xf32, #tpu.memory_space<vmem>>, %arg4: memref<128x128xbf16, #tpu.memory_space<vmem>>, %arg5: memref<1x128xf32, #tpu.memory_space<vmem>>, %arg6: memref<128x128xbf16, #tpu.memory_space<vmem>>, %arg7: memref<1x128xf32, #tpu.memory_space<vmem>>, %arg8: memref<128x128xbf16, #tpu.memory_space<vmem>>, %arg9: memref<1x128xf32, #tpu.memory_space<vmem>>, %arg10: memref<8x128xf32, #tpu.memory_space<vmem>>) attributes {dimension_semantics = [#tpu.dimension_semantics<parallel>], iteration_bounds = array<i64: 1>, scalar_prefetch = 0 : i64, scratch_operands = 0 : i64, tpu.core_type = #tpu.core_type<tc>, window_params = [{transform_indices = @transform_0, window_bounds = array<i64: 8, 128>}, {pipeline_mode = #tpu.pipeline_mode<synchronous>, transform_indices = @transform_1, window_bounds = array<i64: 128, 128>}, {pipeline_mode = #tpu.pipeline_mode<synchronous>, transform_indices = @transform_2, window_bounds = array<i64: 1, 128>}, {pipeline_mode = #tpu.pipeline_mode<synchronous>, transform_indices = @transform_3, window_bounds = array<i64: 128, 128>}, {pipeline_mode = #tpu.pipeline_mode<synchronous>, transform_indices = @transform_4, window_bounds = array<i64: 1, 128>}, {pipeline_mode = #tpu.pipeline_mode<synchronous>, transform_indices = @transform_5, window_bounds = array<i64: 128, 128>}, {pipeline_mode = #tpu.pipeline_mode<synchronous>, transform_indices = @transform_6, window_bounds = array<i64: 1, 128>}, {pipeline_mode = #tpu.pipeline_mode<synchronous>, transform_indices = @transform_7, window_bounds = array<i64: 128, 128>}, {pipeline_mode = #tpu.pipeline_mode<synchronous>, transform_indices = @transform_8, window_bounds = array<i64: 1, 128>}, {transform_indices = @transform_9, window_bounds = array<i64: 8, 128>}]} {
    %c0 = arith.constant 0 : index
    %c0_0 = arith.constant 0 : index
    %0 = vector.load %arg1[%c0, %c0_0] : memref<8x128xbf16, #tpu.memory_space<vmem>>, vector<8x128xbf16>
    %c0_1 = arith.constant 0 : index
    %c0_2 = arith.constant 0 : index
    %1 = vector.load %arg2[%c0_1, %c0_2] : memref<128x128xbf16, #tpu.memory_space<vmem>>, vector<128x128xbf16>
    %c0_3 = arith.constant 0 : index
    %c0_4 = arith.constant 0 : index
    %2 = vector.load %arg3[%c0_3, %c0_4] : memref<1x128xf32, #tpu.memory_space<vmem>>, vector<1x128xf32>
    %cst = arith.constant dense<0.000000e+00> : vector<8x128xf32>
    %3 = tpu.matmul %0, %1, %cst {dimension_numbers = #tpu.dot_dimension_numbers<[1], [0], [0], [1], [0, 0, 1, 1], [], []>} : vector<8x128xbf16>, vector<128x128xbf16>, vector<8x128xf32> -> vector<8x128xf32>
    %4 = vector.broadcast %2 : vector<1x128xf32> to vector<8x128xf32>
    %5 = arith.addf %3, %4 : vector<8x128xf32>
    %cst_5 = arith.constant 5.000000e-01 : f32
    %6 = vector.broadcast %cst_5 : f32 to vector<8x128xf32>
    %7 = arith.mulf %6, %5 : vector<8x128xf32>
    %8 = math.tanh %7 : vector<8x128xf32>
    %cst_6 = arith.constant 5.000000e-01 : f32
    %9 = vector.broadcast %cst_6 : f32 to vector<8x128xf32>
    %10 = arith.mulf %9, %8 : vector<8x128xf32>
    %cst_7 = arith.constant 5.000000e-01 : f32
    %11 = vector.broadcast %cst_7 : f32 to vector<8x128xf32>
    %12 = arith.addf %10, %11 : vector<8x128xf32>
    %13 = arith.truncf %12 : vector<8x128xf32> to vector<8x128xbf16>
    %c0_8 = arith.constant 0 : index
    %c0_9 = arith.constant 0 : index
    %14 = vector.load %arg4[%c0_8, %c0_9] : memref<128x128xbf16, #tpu.memory_space<vmem>>, vector<128x128xbf16>
    %c0_10 = arith.constant 0 : index
    %c0_11 = arith.constant 0 : index
    %15 = vector.load %arg5[%c0_10, %c0_11] : memref<1x128xf32, #tpu.memory_space<vmem>>, vector<1x128xf32>
    %cst_12 = arith.constant dense<0.000000e+00> : vector<8x128xf32>
    %16 = tpu.matmul %13, %14, %cst_12 {dimension_numbers = #tpu.dot_dimension_numbers<[1], [0], [0], [1], [0, 0, 1, 1], [], []>} : vector<8x128xbf16>, vector<128x128xbf16>, vector<8x128xf32> -> vector<8x128xf32>
    %17 = vector.broadcast %15 : vector<1x128xf32> to vector<8x128xf32>
    %18 = arith.addf %16, %17 : vector<8x128xf32>
    %cst_13 = arith.constant 5.000000e-01 : f32
    %19 = vector.broadcast %cst_13 : f32 to vector<8x128xf32>
    %20 = arith.mulf %19, %18 : vector<8x128xf32>
    %21 = math.tanh %20 : vector<8x128xf32>
    %cst_14 = arith.constant 5.000000e-01 : f32
    %22 = vector.broadcast %cst_14 : f32 to vector<8x128xf32>
    %23 = arith.mulf %22, %21 : vector<8x128xf32>
    %cst_15 = arith.constant 5.000000e-01 : f32
    %24 = vector.broadcast %cst_15 : f32 to vector<8x128xf32>
    %25 = arith.addf %23, %24 : vector<8x128xf32>
    %26 = arith.truncf %25 : vector<8x128xf32> to vector<8x128xbf16>
    %c0_16 = arith.constant 0 : index
    %c0_17 = arith.constant 0 : index
    %27 = vector.load %arg6[%c0_16, %c0_17] : memref<128x128xbf16, #tpu.memory_space<vmem>>, vector<128x128xbf16>
    %c0_18 = arith.constant 0 : index
    %c0_19 = arith.constant 0 : index
    %28 = vector.load %arg7[%c0_18, %c0_19] : memref<1x128xf32, #tpu.memory_space<vmem>>, vector<1x128xf32>
    %cst_20 = arith.constant dense<0.000000e+00> : vector<8x128xf32>
    %29 = tpu.matmul %26, %27, %cst_20 {dimension_numbers = #tpu.dot_dimension_numbers<[1], [0], [0], [1], [0, 0, 1, 1], [], []>} : vector<8x128xbf16>, vector<128x128xbf16>, vector<8x128xf32> -> vector<8x128xf32>
    %30 = vector.broadcast %28 : vector<1x128xf32> to vector<8x128xf32>
    %31 = arith.addf %29, %30 : vector<8x128xf32>
    %cst_21 = arith.constant 5.000000e-01 : f32
    %32 = vector.broadcast %cst_21 : f32 to vector<8x128xf32>
    %33 = arith.mulf %32, %31 : vector<8x128xf32>
    %34 = math.tanh %33 : vector<8x128xf32>
    %cst_22 = arith.constant 5.000000e-01 : f32
    %35 = vector.broadcast %cst_22 : f32 to vector<8x128xf32>
    %36 = arith.mulf %35, %34 : vector<8x128xf32>
    %cst_23 = arith.constant 5.000000e-01 : f32
    %37 = vector.broadcast %cst_23 : f32 to vector<8x128xf32>
    %38 = arith.addf %36, %37 : vector<8x128xf32>
    %39 = arith.truncf %38 : vector<8x128xf32> to vector<8x128xbf16>
    %c0_24 = arith.constant 0 : index
    %c0_25 = arith.constant 0 : index
    %40 = vector.load %arg8[%c0_24, %c0_25] : memref<128x128xbf16, #tpu.memory_space<vmem>>, vector<128x128xbf16>
    %c0_26 = arith.constant 0 : index
    %c0_27 = arith.constant 0 : index
    %41 = vector.load %arg9[%c0_26, %c0_27] : memref<1x128xf32, #tpu.memory_space<vmem>>, vector<1x128xf32>
    %cst_28 = arith.constant dense<0.000000e+00> : vector<8x128xf32>
    %42 = tpu.matmul %39, %40, %cst_28 {dimension_numbers = #tpu.dot_dimension_numbers<[1], [0], [0], [1], [0, 0, 1, 1], [], []>} : vector<8x128xbf16>, vector<128x128xbf16>, vector<8x128xf32> -> vector<8x128xf32>
    %43 = vector.broadcast %41 : vector<1x128xf32> to vector<8x128xf32>
    %44 = arith.addf %42, %43 : vector<8x128xf32>
    %cst_29 = arith.constant 5.000000e-01 : f32
    %45 = vector.broadcast %cst_29 : f32 to vector<8x128xf32>
    %46 = arith.mulf %45, %44 : vector<8x128xf32>
    %47 = math.tanh %46 : vector<8x128xf32>
    %cst_30 = arith.constant 5.000000e-01 : f32
    %48 = vector.broadcast %cst_30 : f32 to vector<8x128xf32>
    %49 = arith.mulf %48, %47 : vector<8x128xf32>
    %cst_31 = arith.constant 5.000000e-01 : f32
    %50 = vector.broadcast %cst_31 : f32 to vector<8x128xf32>
    %51 = arith.addf %49, %50 : vector<8x128xf32>
    %c0_32 = arith.constant 0 : index
    %c0_33 = arith.constant 0 : index
    %52 = vector.load %arg10[%c0_32, %c0_33] : memref<8x128xf32, #tpu.memory_space<vmem>>, vector<8x128xf32>
    tpu.vector_store %arg10[%c0_32, %c0_33], %51 {strides = array<i32>} : memref<8x128xf32, #tpu.memory_space<vmem>>, vector<8x128xf32>,
    return
  }
  func.func @transform_0(%arg0: i32) -> (i32, i32) {
    %c0_i32 = arith.constant 0 : i32
    %c0_i32_0 = arith.constant 0 : i32
    return %arg0, %c0_i32 : i32, i32
  }
  func.func @transform_1(%arg0: i32) -> (i32, i32) {
    %c0_i32 = arith.constant 0 : i32
    %c0_i32_0 = arith.constant 0 : i32
    %c0_i32_1 = arith.constant 0 : i32
    return %c0_i32, %c0_i32_0 : i32, i32
  }
  func.func @transform_2(%arg0: i32) -> (i32, i32) {
    %c0_i32 = arith.constant 0 : i32
    %c0_i32_0 = arith.constant 0 : i32
    %c0_i32_1 = arith.constant 0 : i32
    return %c0_i32, %c0_i32_0 : i32, i32
  }
  func.func @transform_3(%arg0: i32) -> (i32, i32) {
    %c0_i32 = arith.constant 0 : i32
    %c0_i32_0 = arith.constant 0 : i32
    %c0_i32_1 = arith.constant 0 : i32
    return %c0_i32, %c0_i32_0 : i32, i32
  }
  func.func @transform_4(%arg0: i32) -> (i32, i32) {
    %c0_i32 = arith.constant 0 : i32
    %c0_i32_0 = arith.constant 0 : i32
    %c0_i32_1 = arith.constant 0 : i32
    return %c0_i32, %c0_i32_0 : i32, i32
  }
  func.func @transform_5(%arg0: i32) -> (i32, i32) {
    %c0_i32 = arith.constant 0 : i32
    %c0_i32_0 = arith.constant 0 : i32
    %c0_i32_1 = arith.constant 0 : i32
    return %c0_i32, %c0_i32_0 : i32, i32
  }
  func.func @transform_6(%arg0: i32) -> (i32, i32) {
    %c0_i32 = arith.constant 0 : i32
    %c0_i32_0 = arith.constant 0 : i32
    %c0_i32_1 = arith.constant 0 : i32
    return %c0_i32, %c0_i32_0 : i32, i32
  }
  func.func @transform_7(%arg0: i32) -> (i32, i32) {
    %c0_i32 = arith.constant 0 : i32
    %c0_i32_0 = arith.constant 0 : i32
    %c0_i32_1 = arith.constant 0 : i32
    return %c0_i32, %c0_i32_0 : i32, i32
  }
  func.func @transform_8(%arg0: i32) -> (i32, i32) {
    %c0_i32 = arith.constant 0 : i32
    %c0_i32_0 = arith.constant 0 : i32
    %c0_i32_1 = arith.constant 0 : i32
    return %c0_i32, %c0_i32_0 : i32, i32
  }
  func.func @transform_9(%arg0: i32) -> (i32, i32) {
    %c0_i32 = arith.constant 0 : i32
    %c0_i32_0 = arith.constant 0 : i32
    return %arg0, %c0_i32 : i32, i32
  }
}

</mosaic_0001>

<llo_original>
// kernel: mlp_forward.1
$region0: #{mlp_forward.1}
  #allocation0 [shape = 'u32[]', space=smem, size = 0x4, offset = 0x4, fixed_abs, tag = 'smem constant byte address 0x4 - core index']
  #allocation1 [shape = 'u32[144,128]{1,0:T(1,128)}', space=vmem, size = 0x12000, scoped, tag = 'internal scratch']
  %s0 = inlined_call_operand.vmem [shape: bf16[8,128], index: 0, kind: input, shape index: {}]
  %s1 = inlined_call_operand.hbm [shape: bf16[128,128], index: 1, kind: input, shape index: {}]
  %s2 = inlined_call_operand.vmem [shape: f32[1,128], index: 2, kind: input, shape index: {}]
  %s3 = inlined_call_operand.hbm [shape: bf16[128,128], index: 3, kind: input, shape index: {}]
  %s4 = inlined_call_operand.vmem [shape: f32[1,128], index: 4, kind: input, shape index: {}]
  %s5 = inlined_call_operand.hbm [shape: bf16[128,128], index: 5, kind: input, shape index: {}]
  %s6 = inlined_call_operand.vmem [shape: f32[1,128], index: 6, kind: input, shape index: {}]
  %s7 = inlined_call_operand.hbm [shape: bf16[128,128], index: 7, kind: input, shape index: {}]
  %s8 = inlined_call_operand.vmem [shape: f32[1,128], index: 8, kind: input, shape index: {}]
  %s9 = inlined_call_operand.hbm [shape: f32[8,128], index: 9, kind: output, shape index: {}]
  %s10 = sld [smem:[#allocation0]]
  $region62: #{mlp_forward.1} parent=0
    _
  %s12 = ssub.s32 1, %s10
  %s13 = scalar_select 0, %s12, %s10
  $region1: #{mlp_forward.1} parent=0
    #allocation2 [shape = 'u8[32768]{0}', space=vmem, size = 0x8000, scoped, tag = 'input window, operand 1, single buffered']
    #allocation3 [shape = 's32[1]{0}', space=sflag, size = 0x4, scoped, tag = 'scoped memory for mlp_forward.1']
    #allocation4 [shape = 's32[1]{0}', space=sflag, size = 0x4, scoped, tag = 'scoped memory for mlp_forward.1']
    #allocation5 [shape = 'u8[32768]{0}', space=vmem, size = 0x8000, scoped, tag = 'input window, operand 3, single buffered']
    #allocation6 [shape = 's32[1]{0}', space=sflag, size = 0x4, scoped, tag = 'scoped memory for mlp_forward.1']
    #allocation7 [shape = 'u8[32768]{0}', space=vmem, size = 0x8000, scoped, tag = 'input window, operand 5, single buffered']
    #allocation8 [shape = 'u8[32768]{0}', space=vmem, size = 0x8000, scoped, tag = 'input window, operand 7, single buffered']
    #allocation9 [shape = 's32[1]{0}', space=sflag, size = 0x4, scoped, tag = 'scoped memory for mlp_forward.1']
    #allocation10 [shape = 'u8[4096]{0}', space=vmem, size = 0x1000, scoped, tag = 'output window, operand 0, single buffered']
    %14 = vsyncpa [#allocation3], 0
    %15 = vsyncpa [#allocation6], 0
    %16 = vsyncpa [#allocation9], 0
    %17 = vsyncpa [#allocation4], 0
    // Predicated region
    $region2: #{mlp_forward.1} parent=1 // pred_check
      _
    $region3: #{mlp_forward.1} parent=1 // pred_check_branch
      %19 = sbr.rel (0) target = $region5
    $region4: #{mlp_forward.1} parent=1 // pred_region
      _
    $region5: #{mlp_forward.1} parent=1 // pred_fallthru
      _
    // Predicated region
    $region6: #{mlp_forward.1} parent=1 // pred_check
      _
    $region7: #{mlp_forward.1} parent=1 // pred_check_branch
      %21 = sbr.rel (0) target = $region9
    $region8: #{mlp_forward.1} parent=1 // pred_region
      %s23 = ssub.s32 1024, 1024
      %24 = vsyncadd [#allocation3], %s23
      %s25 = sshll.u32 [#allocation2], 4
      %s26 = int_to_ptr.vmem [resolvable:$true] %s25
      %31 = dma.hbm_to_vmem [thread:$0]  %s1, 1024, %s26, [#allocation3], 64, 64, 4
    $region9: #{mlp_forward.1} parent=1 // pred_fallthru
      _
    // Predicated region
    $region10: #{mlp_forward.1} parent=1 // pred_check
      _
    $region11: #{mlp_forward.1} parent=1 // pred_check_branch
      %33 = sbr.rel (0) target = $region13
    $region12: #{mlp_forward.1} parent=1 // pred_region
      _
    $region13: #{mlp_forward.1} parent=1 // pred_fallthru
      _
    // Predicated region
    $region14: #{mlp_forward.1} parent=1 // pred_check
      _
    $region15: #{mlp_forward.1} parent=1 // pred_check_branch
      %35 = sbr.rel (0) target = $region17
    $region16: #{mlp_forward.1} parent=1 // pred_region
      %s37 = ssub.s32 1024, 1024
      %38 = vsyncadd [#allocation6], %s37
      %s39 = sshll.u32 [#allocation5], 4
      %s40 = int_to_ptr.vmem [resolvable:$true] %s39
      %45 = dma.hbm_to_vmem [thread:$0]  %s3, 1024, %s40, [#allocation6], 64, 64, 4
    $region17: #{mlp_forward.1} parent=1 // pred_fallthru
      _
    // Predicated region
    $region18: #{mlp_forward.1} parent=1 // pred_check
      _
    $region19: #{mlp_forward.1} parent=1 // pred_check_branch
      %47 = sbr.rel (0) target = $region21
    $region20: #{mlp_forward.1} parent=1 // pred_region
      _
    $region21: #{mlp_forward.1} parent=1 // pred_fallthru
      _
    // Predicated region
    $region22: #{mlp_forward.1} parent=1 // pred_check
      _
    $region23: #{mlp_forward.1} parent=1 // pred_check_branch
      %49 = sbr.rel (0) target = $region25
    $region24: #{mlp_forward.1} parent=1 // pred_region
      %s51 = ssub.s32 1024, 1024
      %52 = vsyncadd [#allocation6], %s51
      %s53 = sshll.u32 [#allocation7], 4
      %s54 = int_to_ptr.vmem [resolvable:$true] %s53
      %59 = dma.hbm_to_vmem [thread:$0]  %s5, 1024, %s54, [#allocation6], 64, 64, 4
    $region25: #{mlp_forward.1} parent=1 // pred_fallthru
      _
    // Predicated region
    $region26: #{mlp_forward.1} parent=1 // pred_check
      _
    $region27: #{mlp_forward.1} parent=1 // pred_check_branch
      %61 = sbr.rel (0) target = $region29
    $region28: #{mlp_forward.1} parent=1 // pred_region
      _
    $region29: #{mlp_forward.1} parent=1 // pred_fallthru
      _
    // Predicated region
    $region30: #{mlp_forward.1} parent=1 // pred_check
      _
    $region31: #{mlp_forward.1} parent=1 // pred_check_branch
      %63 = sbr.rel (0) target = $region33
    $region32: #{mlp_forward.1} parent=1 // pred_region
      %s65 = ssub.s32 1024, 1024
      %66 = vsyncadd [#allocation9], %s65
      %s67 = sshll.u32 [#allocation8], 4
      %s68 = int_to_ptr.vmem [resolvable:$true] %s67
      %73 = dma.hbm_to_vmem [thread:$0]  %s7, 1024, %s68, [#allocation9], 64, 64, 4
    $region33: #{mlp_forward.1} parent=1 // pred_fallthru
      _
    // Predicated region
    $region34: #{mlp_forward.1} parent=1 // pred_check
      _
    $region35: #{mlp_forward.1} parent=1 // pred_check_branch
      %75 = sbr.rel (0) target = $region37
    $region36: #{mlp_forward.1} parent=1 // pred_region
      _
    $region37: #{mlp_forward.1} parent=1 // pred_fallthru
      _
    // Predicated region
    $region38: #{mlp_forward.1} parent=1 // pred_check
      _
    $region39: #{mlp_forward.1} parent=1 // pred_check_branch
      %77 = sbr.rel (0) target = $region41
    $region40: #{mlp_forward.1} parent=1 // pred_region
      %78 = dma.done [#allocation3], 1024
    $region41: #{mlp_forward.1} parent=1 // pred_fallthru
      _
    // Predicated region
    $region42: #{mlp_forward.1} parent=1 // pred_check
      _
    $region43: #{mlp_forward.1} parent=1 // pred_check_branch
      %80 = sbr.rel (0) target = $region45
    $region44: #{mlp_forward.1} parent=1 // pred_region
      %81 = dma.done [#allocation6], 1024
    $region45: #{mlp_forward.1} parent=1 // pred_fallthru
      _
    // Predicated region
    $region46: #{mlp_forward.1} parent=1 // pred_check
      _
    $region47: #{mlp_forward.1} parent=1 // pred_check_branch
      %83 = sbr.rel (0) target = $region49
    $region48: #{mlp_forward.1} parent=1 // pred_region
      %84 = dma.done [#allocation6], 1024
    $region49: #{mlp_forward.1} parent=1 // pred_fallthru
      _
    // Predicated region
    $region50: #{mlp_forward.1} parent=1 // pred_check
      _
    $region51: #{mlp_forward.1} parent=1 // pred_check_branch
      %86 = sbr.rel (0) target = $region53
    $region52: #{mlp_forward.1} parent=1 // pred_region
      %87 = dma.done [#allocation9], 1024
    $region53: #{mlp_forward.1} parent=1 // pred_fallthru
      _
    %v89 = vld [vmem:[%s0] sm:$0xf]
    %v90 = vld [vmem:[#allocation2] sm:$0xf]
    %v91 = vld [vmem:[#allocation2 + $0x4] sm:$0xf]
    %v92 = vld [vmem:[#allocation2 + $0x8] sm:$0xf]
    %v93 = vld [vmem:[#allocation2 + $0xc] sm:$0xf]
    %v94 = vld [vmem:[#allocation2 + $0x10] sm:$0xf]
    %v95 = vld [vmem:[#allocation2 + $0x14] sm:$0xf]
    %v96 = vld [vmem:[#allocation2 + $0x18] sm:$0xf]
    %v97 = vld [vmem:[#allocation2 + $0x1c] sm:$0xf]
    %v98 = vld [vmem:[#allocation2 + $0x20] sm:$0xf]
    %v99 = vld [vmem:[#allocation2 + $0x24] sm:$0xf]
    %v100 = vld [vmem:[#allocation2 + $0x28] sm:$0xf]
    %v101 = vld [vmem:[#allocation2 + $0x2c] sm:$0xf]
    %v102 = vld [vmem:[#allocation2 + $0x30] sm:$0xf]
    %v103 = vld [vmem:[#allocation2 + $0x34] sm:$0xf]
    %v104 = vld [vmem:[#allocation2 + $0x38] sm:$0xf]
    %v105 = vld [vmem:[#allocation2 + $0x3c] sm:$0xf]
    %v106 = vld [vmem:[%s2] sm:$0x1]
    %v108 = vlaneseq
    %v109 = vshrl.u32 %v108, 7
    %v110 = vsub.s32 0, %v109
    %v111 = vrot.slane %v106, %v110
    %v129 = vunpack.c.l.b16 %v90
    %v130 = vunpack.c.l.b16 %v91
    %v131 = vunpack.c.l.b16 %v92
    %v132 = vunpack.c.l.b16 %v93
    %v133 = vunpack.c.l.b16 %v94
    %v134 = vunpack.c.l.b16 %v95
    %v135 = vunpack.c.l.b16 %v96
    %v136 = vunpack.c.l.b16 %v97
    %v137 = vunpack.c.l.b16 %v98
    %v138 = vunpack.c.l.b16 %v99
    %v139 = vunpack.c.l.b16 %v100
    %v140 = vunpack.c.l.b16 %v101
    %v141 = vunpack.c.l.b16 %v102
    %v142 = vunpack.c.l.b16 %v103
    %v143 = vunpack.c.l.b16 %v104
    %v144 = vunpack.c.l.b16 %v105
    %v145 = vpack.c.b16 %v130, %v129
    %v146 = vpack.c.b16 %v132, %v131
    %v147 = vpack.c.b16 %v134, %v133
    %v148 = vpack.c.b16 %v136, %v135
    %v149 = vpack.c.b16 %v138, %v137
    %v150 = vpack.c.b16 %v140, %v139
    %v151 = vpack.c.b16 %v142, %v141
    %v152 = vpack.c.b16 %v144, %v143
    %161 = vmatprep.subr.bf16.mxu0 0
    %162 = vmatpush1.bf16.msra.mxu0 %v145
    %163 = vmatprep.subr.bf16.mxu0 0
    %164 = vmatpush1.bf16.msra.mxu0 %v146
    %165 = vmatprep.subr.bf16.mxu0 0
    %166 = vmatpush1.bf16.msra.mxu0 %v147
    %167 = vmatprep.subr.bf16.mxu0 0
    %168 = vmatpush1.bf16.msra.mxu0 %v148
    %169 = vmatprep.subr.bf16.mxu0 0
    %170 = vmatpush1.bf16.msra.mxu0 %v149
    %171 = vmatprep.subr.bf16.mxu0 0
    %172 = vmatpush1.bf16.msra.mxu0 %v150
    %173 = vmatprep.subr.bf16.mxu0 0
    %174 = vmatpush1.bf16.msra.mxu0 %v151
    %175 = vmatprep.subr.bf16.mxu0 0
    %176 = vmatpush1.bf16.msra.mxu0 %v152
    %177 = vmatprep.subr.bf16.mxu0 0
    %178 = vmatpush1.bf16.msra.mxu0 0
    %179 = vmatprep.subr.bf16.mxu0 0
    %180 = vmatpush1.bf16.msra.mxu0 0
    %181 = vmatprep.subr.bf16.mxu0 0
    %182 = vmatpush1.bf16.msra.mxu0 0
    %183 = vmatprep.subr.bf16.mxu0 0
    %184 = vmatpush1.bf16.msra.mxu0 0
    %185 = vmatprep.subr.bf16.mxu0 0
    %186 = vmatpush1.bf16.msra.mxu0 0
    %187 = vmatprep.subr.bf16.mxu0 0
    %188 = vmatpush1.bf16.msra.mxu0 0
    %189 = vmatprep.subr.bf16.mxu0 0
    %190 = vmatpush1.bf16.msra.mxu0 0
    %191 = vmatprep.subr.bf16.mxu0 0
    %192 = vmatpush1.bf16.msra.mxu0 0
    %193 = vmatprep.mubr.bf16.mxu0 0
    %194 = vmatmul.mubr.bf16.gmra.mrb[0].mxu0 %v89
    %v195 = vpop.f32.mrb[0].mxu0
    %v196 = vadd.f32 %v111, %v195
    %v197 = vpop.f32.mrb[0].mxu0
    %v198 = vpop.f32.mrb[0].mxu0
    %v199 = vpop.f32.mrb[0].mxu0
    %200 = vdwg.mxu0
    %v201 = vmul.f32 %v196, 0.5
    %v202 = vtanh.pop %v201
    %v203 = vmul.f32 %v202, 0.5
    %v204 = vadd.f32 %v203, 0.5
    %v205 = vpack.c.bf16 %v204, %v204
    %v206 = vld [vmem:[#allocation5] sm:$0xf]
    %v207 = vld [vmem:[#allocation5 + $0x4] sm:$0xf]
    %v208 = vld [vmem:[#allocation5 + $0x8] sm:$0xf]
    %v209 = vld [vmem:[#allocation5 + $0xc] sm:$0xf]
    %v210 = vld [vmem:[#allocation5 + $0x10] sm:$0xf]
    %v211 = vld [vmem:[#allocation5 + $0x14] sm:$0xf]
    %v212 = vld [vmem:[#allocation5 + $0x18] sm:$0xf]
    %v213 = vld [vmem:[#allocation5 + $0x1c] sm:$0xf]
    %v214 = vld [vmem:[#allocation5 + $0x20] sm:$0xf]
    %v215 = vld [vmem:[#allocation5 + $0x24] sm:$0xf]
    %v216 = vld [vmem:[#allocation5 + $0x28] sm:$0xf]
    %v217 = vld [vmem:[#allocation5 + $0x2c] sm:$0xf]
    %v218 = vld [vmem:[#allocation5 + $0x30] sm:$0xf]
    %v219 = vld [vmem:[#allocation5 + $0x34] sm:$0xf]
    %v220 = vld [vmem:[#allocation5 + $0x38] sm:$0xf]
    %v221 = vld [vmem:[#allocation5 + $0x3c] sm:$0xf]
    %v222 = vld [vmem:[%s4] sm:$0x1]
    %v224 = vlaneseq
    %v225 = vshrl.u32 %v224, 7
    %v226 = vsub.s32 0, %v225
    %v227 = vrot.slane %v222, %v226
    %v245 = vunpack.c.l.b16 %v206
    %v246 = vunpack.c.l.b16 %v207
    %v247 = vunpack.c.l.b16 %v208
    %v248 = vunpack.c.l.b16 %v209
    %v249 = vunpack.c.l.b16 %v210
    %v250 = vunpack.c.l.b16 %v211
    %v251 = vunpack.c.l.b16 %v212
    %v252 = vunpack.c.l.b16 %v213
    %v253 = vunpack.c.l.b16 %v214
    %v254 = vunpack.c.l.b16 %v215
    %v255 = vunpack.c.l.b16 %v216
    %v256 = vunpack.c.l.b16 %v217
    %v257 = vunpack.c.l.b16 %v218
    %v258 = vunpack.c.l.b16 %v219
    %v259 = vunpack.c.l.b16 %v220
    %v260 = vunpack.c.l.b16 %v221
    %v261 = vpack.c.b16 %v246, %v245
    %v262 = vpack.c.b16 %v248, %v247
    %v263 = vpack.c.b16 %v250, %v249
    %v264 = vpack.c.b16 %v252, %v251
    %v265 = vpack.c.b16 %v254, %v253
    %v266 = vpack.c.b16 %v256, %v255
    %v267 = vpack.c.b16 %v258, %v257
    %v268 = vpack.c.b16 %v260, %v259
    %277 = vmatprep.subr.bf16.mxu0 0
    %278 = vmatpush1.bf16.msra.mxu0 %v261
    %279 = vmatprep.subr.bf16.mxu0 0
    %280 = vmatpush1.bf16.msra.mxu0 %v262
    %281 = vmatprep.subr.bf16.mxu0 0
    %282 = vmatpush1.bf16.msra.mxu0 %v263
    %283 = vmatprep.subr.bf16.mxu0 0
    %284 = vmatpush1.bf16.msra.mxu0 %v264
    %285 = vmatprep.subr.bf16.mxu0 0
    %286 = vmatpush1.bf16.msra.mxu0 %v265
    %287 = vmatprep.subr.bf16.mxu0 0
    %288 = vmatpush1.bf16.msra.mxu0 %v266
    %289 = vmatprep.subr.bf16.mxu0 0
    %290 = vmatpush1.bf16.msra.mxu0 %v267
    %291 = vmatprep.subr.bf16.mxu0 0
    %292 = vmatpush1.bf16.msra.mxu0 %v268
    %293 = vmatprep.subr.bf16.mxu0 0
    %294 = vmatpush1.bf16.msra.mxu0 0
    %295 = vmatprep.subr.bf16.mxu0 0
    %296 = vmatpush1.bf16.msra.mxu0 0
    %297 = vmatprep.subr.bf16.mxu0 0
    %298 = vmatpush1.bf16.msra.mxu0 0
    %299 = vmatprep.subr.bf16.mxu0 0
    %300 = vmatpush1.bf16.msra.mxu0 0
    %301 = vmatprep.subr.bf16.mxu0 0
    %302 = vmatpush1.bf16.msra.mxu0 0
    %303 = vmatprep.subr.bf16.mxu0 0
    %304 = vmatpush1.bf16.msra.mxu0 0
    %305 = vmatprep.subr.bf16.mxu0 0
    %306 = vmatpush1.bf16.msra.mxu0 0
    %307 = vmatprep.subr.bf16.mxu0 0
    %308 = vmatpush1.bf16.msra.mxu0 0
    %309 = vmatprep.mubr.bf16.mxu0 0
    %310 = vmatmul.mubr.bf16.gmra.mrb[0].mxu0 %v205
    %v311 = vpop.f32.mrb[0].mxu0
    %v312 = vadd.f32 %v227, %v311
    %v313 = vpop.f32.mrb[0].mxu0
    %v314 = vpop.f32.mrb[0].mxu0
    %v315 = vpop.f32.mrb[0].mxu0
    %316 = vdwg.mxu0
    %v317 = vmul.f32 %v312, 0.5
    %v318 = vtanh.pop %v317
    %v319 = vmul.f32 %v318, 0.5
    %v320 = vadd.f32 %v319, 0.5
    %v321 = vpack.c.bf16 %v320, %v320
    %v322 = vld [vmem:[#allocation7] sm:$0xf]
    %v323 = vld [vmem:[#allocation7 + $0x4] sm:$0xf]
    %v324 = vld [vmem:[#allocation7 + $0x8] sm:$0xf]
    %v325 = vld [vmem:[#allocation7 + $0xc] sm:$0xf]
    %v326 = vld [vmem:[#allocation7 + $0x10] sm:$0xf]
    %v327 = vld [vmem:[#allocation7 + $0x14] sm:$0xf]
    %v328 = vld [vmem:[#allocation7 + $0x18] sm:$0xf]
    %v329 = vld [vmem:[#allocation7 + $0x1c] sm:$0xf]
    %v330 = vld [vmem:[#allocation7 + $0x20] sm:$0xf]
    %v331 = vld [vmem:[#allocation7 + $0x24] sm:$0xf]
    %v332 = vld [vmem:[#allocation7 + $0x28] sm:$0xf]
    %v333 = vld [vmem:[#allocation7 + $0x2c] sm:$0xf]
    %v334 = vld [vmem:[#allocation7 + $0x30] sm:$0xf]
    %v335 = vld [vmem:[#allocation7 + $0x34] sm:$0xf]
    %v336 = vld [vmem:[#allocation7 + $0x38] sm:$0xf]
    %v337 = vld [vmem:[#allocation7 + $0x3c] sm:$0xf]
    %v338 = vld [vmem:[%s6] sm:$0x1]
    %v340 = vlaneseq
    %v341 = vshrl.u32 %v340, 7
    %v342 = vsub.s32 0, %v341
    %v343 = vrot.slane %v338, %v342
    %v361 = vunpack.c.l.b16 %v322
    %v362 = vunpack.c.l.b16 %v323
    %v363 = vunpack.c.l.b16 %v324
    %v364 = vunpack.c.l.b16 %v325
    %v365 = vunpack.c.l.b16 %v326
    %v366 = vunpack.c.l.b16 %v327
    %v367 = vunpack.c.l.b16 %v328
    %v368 = vunpack.c.l.b16 %v329
    %v369 = vunpack.c.l.b16 %v330
    %v370 = vunpack.c.l.b16 %v331
    %v371 = vunpack.c.l.b16 %v332
    %v372 = vunpack.c.l.b16 %v333
    %v373 = vunpack.c.l.b16 %v334
    %v374 = vunpack.c.l.b16 %v335
    %v375 = vunpack.c.l.b16 %v336
    %v376 = vunpack.c.l.b16 %v337
    %v377 = vpack.c.b16 %v362, %v361
    %v378 = vpack.c.b16 %v364, %v363
    %v379 = vpack.c.b16 %v366, %v365
    %v380 = vpack.c.b16 %v368, %v367
    %v381 = vpack.c.b16 %v370, %v369
    %v382 = vpack.c.b16 %v372, %v371
    %v383 = vpack.c.b16 %v374, %v373
    %v384 = vpack.c.b16 %v376, %v375
    %393 = vmatprep.subr.bf16.mxu0 0
    %394 = vmatpush1.bf16.msra.mxu0 %v377
    %395 = vmatprep.subr.bf16.mxu0 0
    %396 = vmatpush1.bf16.msra.mxu0 %v378
    %397 = vmatprep.subr.bf16.mxu0 0
    %398 = vmatpush1.bf16.msra.mxu0 %v379
    %399 = vmatprep.subr.bf16.mxu0 0
    %400 = vmatpush1.bf16.msra.mxu0 %v380
    %401 = vmatprep.subr.bf16.mxu0 0
    %402 = vmatpush1.bf16.msra.mxu0 %v381
    %403 = vmatprep.subr.bf16.mxu0 0
    %404 = vmatpush1.bf16.msra.mxu0 %v382
    %405 = vmatprep.subr.bf16.mxu0 0
    %406 = vmatpush1.bf16.msra.mxu0 %v383
    %407 = vmatprep.subr.bf16.mxu0 0
    %408 = vmatpush1.bf16.msra.mxu0 %v384
    %409 = vmatprep.subr.bf16.mxu0 0
    %410 = vmatpush1.bf16.msra.mxu0 0
    %411 = vmatprep.subr.bf16.mxu0 0
    %412 = vmatpush1.bf16.msra.mxu0 0
    %413 = vmatprep.subr.bf16.mxu0 0
    %414 = vmatpush1.bf16.msra.mxu0 0
    %415 = vmatprep.subr.bf16.mxu0 0
    %416 = vmatpush1.bf16.msra.mxu0 0
    %417 = vmatprep.subr.bf16.mxu0 0
    %418 = vmatpush1.bf16.msra.mxu0 0
    %419 = vmatprep.subr.bf16.mxu0 0
    %420 = vmatpush1.bf16.msra.mxu0 0
    %421 = vmatprep.subr.bf16.mxu0 0
    %422 = vmatpush1.bf16.msra.mxu0 0
    %423 = vmatprep.subr.bf16.mxu0 0
    %424 = vmatpush1.bf16.msra.mxu0 0
    %425 = vmatprep.mubr.bf16.mxu0 0
    %426 = vmatmul.mubr.bf16.gmra.mrb[0].mxu0 %v321
    %v427 = vpop.f32.mrb[0].mxu0
    %v428 = vadd.f32 %v343, %v427
    %v429 = vpop.f32.mrb[0].mxu0
    %v430 = vpop.f32.mrb[0].mxu0
    %v431 = vpop.f32.mrb[0].mxu0
    %432 = vdwg.mxu0
    %v433 = vmul.f32 %v428, 0.5
    %v434 = vtanh.pop %v433
    %v435 = vmul.f32 %v434, 0.5
    %v436 = vadd.f32 %v435, 0.5
    %v437 = vpack.c.bf16 %v436, %v436
    %v438 = vld [vmem:[#allocation8] sm:$0xf]
    %v439 = vld [vmem:[#allocation8 + $0x4] sm:$0xf]
    %v440 = vld [vmem:[#allocation8 + $0x8] sm:$0xf]
    %v441 = vld [vmem:[#allocation8 + $0xc] sm:$0xf]
    %v442 = vld [vmem:[#allocation8 + $0x10] sm:$0xf]
    %v443 = vld [vmem:[#allocation8 + $0x14] sm:$0xf]
    %v444 = vld [vmem:[#allocation8 + $0x18] sm:$0xf]
    %v445 = vld [vmem:[#allocation8 + $0x1c] sm:$0xf]
    %v446 = vld [vmem:[#allocation8 + $0x20] sm:$0xf]
    %v447 = vld [vmem:[#allocation8 + $0x24] sm:$0xf]
    %v448 = vld [vmem:[#allocation8 + $0x28] sm:$0xf]
    %v449 = vld [vmem:[#allocation8 + $0x2c] sm:$0xf]
    %v450 = vld [vmem:[#allocation8 + $0x30] sm:$0xf]
    %v451 = vld [vmem:[#allocation8 + $0x34] sm:$0xf]
    %v452 = vld [vmem:[#allocation8 + $0x38] sm:$0xf]
    %v453 = vld [vmem:[#allocation8 + $0x3c] sm:$0xf]
    %v454 = vld [vmem:[%s8] sm:$0x1]
    %v456 = vlaneseq
    %v457 = vshrl.u32 %v456, 7
    %v458 = vsub.s32 0, %v457
    %v459 = vrot.slane %v454, %v458
    %v477 = vunpack.c.l.b16 %v438
    %v478 = vunpack.c.l.b16 %v439
    %v479 = vunpack.c.l.b16 %v440
    %v480 = vunpack.c.l.b16 %v441
    %v481 = vunpack.c.l.b16 %v442
    %v482 = vunpack.c.l.b16 %v443
    %v483 = vunpack.c.l.b16 %v444
    %v484 = vunpack.c.l.b16 %v445
    %v485 = vunpack.c.l.b16 %v446
    %v486 = vunpack.c.l.b16 %v447
    %v487 = vunpack.c.l.b16 %v448
    %v488 = vunpack.c.l.b16 %v449
    %v489 = vunpack.c.l.b16 %v450
    %v490 = vunpack.c.l.b16 %v451
    %v491 = vunpack.c.l.b16 %v452
    %v492 = vunpack.c.l.b16 %v453
    %v493 = vpack.c.b16 %v478, %v477
    %v494 = vpack.c.b16 %v480, %v479
    %v495 = vpack.c.b16 %v482, %v481
    %v496 = vpack.c.b16 %v484, %v483
    %v497 = vpack.c.b16 %v486, %v485
    %v498 = vpack.c.b16 %v488, %v487
    %v499 = vpack.c.b16 %v490, %v489
    %v500 = vpack.c.b16 %v492, %v491
    %509 = vmatprep.subr.bf16.mxu0 0
    %510 = vmatpush1.bf16.msra.mxu0 %v493
    %511 = vmatprep.subr.bf16.mxu0 0
    %512 = vmatpush1.bf16.msra.mxu0 %v494
    %513 = vmatprep.subr.bf16.mxu0 0
    %514 = vmatpush1.bf16.msra.mxu0 %v495
    %515 = vmatprep.subr.bf16.mxu0 0
    %516 = vmatpush1.bf16.msra.mxu0 %v496
    %517 = vmatprep.subr.bf16.mxu0 0
    %518 = vmatpush1.bf16.msra.mxu0 %v497
    %519 = vmatprep.subr.bf16.mxu0 0
    %520 = vmatpush1.bf16.msra.mxu0 %v498
    %521 = vmatprep.subr.bf16.mxu0 0
    %522 = vmatpush1.bf16.msra.mxu0 %v499
    %523 = vmatprep.subr.bf16.mxu0 0
    %524 = vmatpush1.bf16.msra.mxu0 %v500
    %525 = vmatprep.subr.bf16.mxu0 0
    %526 = vmatpush1.bf16.msra.mxu0 0
    %527 = vmatprep.subr.bf16.mxu0 0
    %528 = vmatpush1.bf16.msra.mxu0 0
    %529 = vmatprep.subr.bf16.mxu0 0
    %530 = vmatpush1.bf16.msra.mxu0 0
    %531 = vmatprep.subr.bf16.mxu0 0
    %532 = vmatpush1.bf16.msra.mxu0 0
    %533 = vmatprep.subr.bf16.mxu0 0
    %534 = vmatpush1.bf16.msra.mxu0 0
    %535 = vmatprep.subr.bf16.mxu0 0
    %536 = vmatpush1.bf16.msra.mxu0 0
    %537 = vmatprep.subr.bf16.mxu0 0
    %538 = vmatpush1.bf16.msra.mxu0 0
    %539 = vmatprep.subr.bf16.mxu0 0
    %540 = vmatpush1.bf16.msra.mxu0 0
    %541 = vmatprep.mubr.bf16.mxu0 0
    %542 = vmatmul.mubr.bf16.gmra.mrb[0].mxu0 %v437
    %v543 = vpop.f32.mrb[0].mxu0
    %v544 = vadd.f32 %v459, %v543
    %v545 = vpop.f32.mrb[0].mxu0
    %v546 = vpop.f32.mrb[0].mxu0
    %v547 = vpop.f32.mrb[0].mxu0
    %548 = vdwg.mxu0
    %v549 = vmul.f32 %v544, 0.5
    %v550 = vtanh.pop %v549
    %v551 = vmul.f32 %v550, 0.5
    %v552 = vadd.f32 %v551, 0.5
    %553 = vst [vmem:[#allocation10] sm:$0xff] %v552
    // Predicated region
    $region54: #{mlp_forward.1} parent=1 // pred_check
      _
    $region55: #{mlp_forward.1} parent=1 // pred_check_branch
      %555 = sbr.rel (0) target = $region57
    $region56: #{mlp_forward.1} parent=1 // pred_region
      %s557 = ssub.s32 128, 128
      %558 = vsyncadd [#allocation4], %s557
      %s560 = sshll.u32 [#allocation10], 4
      %s561 = int_to_ptr.vmem [resolvable:$true] %s560
      %563 = dma.vmem_to_hbm [thread:$0]  %s561, 128, %s9, [#allocation4]
    $region57: #{mlp_forward.1} parent=1 // pred_fallthru
      _
    // Predicated region
    $region58: #{mlp_forward.1} parent=1 // pred_check
      _
    $region59: #{mlp_forward.1} parent=1 // pred_check_branch
      %565 = sbr.rel (0) target = $region61
    $region60: #{mlp_forward.1} parent=1 // pred_region
      %566 = dma.done [#allocation4], 128
    $region61: #{mlp_forward.1} parent=1 // pred_fallthru
      _
    %567 = vsyncpa [#allocation3], 1
    %568 = vsyncpa [#allocation6], 1
    %569 = vsyncpa [#allocation9], 1
    %570 = vsyncpa [#allocation4], 1

</llo_original>
